<compile_context>
chip_gen: v7x
topology: tpu7x:2x2x1
jax: 0.10.0
libtpu: 0.0.40
codegen_flags: <defaults>
</compile_context>

<pallas_src>
import functools

import jax
import jax.numpy as jnp
from jax.experimental import pallas as pl
from jax.experimental.pallas import tpu as pltpu

LANE = 128          # vreg lane width -> pad output (N) dims to this
BF16_SUBLANE = 16   # packed bf16 vreg is [16, 128] -> batch tiles align to 16


def _round_up(n, m):
    return ((n + m - 1) // m) * m


def _fused_mlp_kernel(x_ref, *refs, num_layers: int):
    """refs = (w_0, ..., w_{L-1}, b_all, out).

    One grid step = one batch tile; all layers are computed back-to-back so
    activations never round-trip through HBM.
    """
    w_refs = refs[:num_layers]
    b_all = refs[num_layers][...]            # (num_layers, maxN_pad) f32
    o_ref = refs[num_layers + 1]

    h = x_ref[...].astype(jnp.bfloat16)      # in-kernel cast to MXU-native bf16
    for i in range(num_layers):
        w = w_refs[i][...]                   # bf16 (K_i, N_pad_i)
        n_pad = w.shape[1]
        y = jnp.dot(h, w, preferred_element_type=jnp.float32)   # MXU, f32 acc
        y = y + b_all[i:i + 1, :n_pad]                           # f32 epilogue
        if i < num_layers - 1:
            h = jnp.maximum(y, 0.0).astype(jnp.bfloat16)         # ReLU
        else:
            o_ref[...] = y.astype(o_ref.dtype)                   # lane-dense vst


def init_mlp_params(key, input_size, hidden_layers, output_size):
    """Deterministic init mimicking nn.Linear default U(-1/sqrt(fan_in), ..)."""
    sizes = [input_size] + list(hidden_layers) + [output_size]
    params = []
    for i in range(len(sizes) - 1):
        fan_in, fan_out = sizes[i], sizes[i + 1]
        key, kw, kb = jax.random.split(key, 3)
        bound = 1.0 / (fan_in ** 0.5)
        w = jax.random.uniform(kw, (fan_in, fan_out), jnp.float32, -bound, bound)
        b = jax.random.uniform(kb, (fan_out,), jnp.float32, -bound, bound)
        params.append((w, b))
    return params


def prepare_params(params):
    """Pad only the N (output-lane) dims to 128 multiples; layer-0 K stays true.

    For layers i>0 the K dim equals the previous layer's padded N; since the
    padded activation lanes are exactly 0 (zero-padded weights + zero-padded
    biases + ReLU(0)=0), the padded rows/lanes contribute exactly 0.
    Biases are stacked into one (num_layers, maxN) f32 operand.
    """
    weights = []
    n_pads = []
    prev_n_pad = None
    for li, (w, _) in enumerate(params):
        din, dout = w.shape
        k = din if li == 0 else prev_n_pad          # true K for layer 0
        n_pad = _round_up(dout, LANE)
        w_p = jnp.zeros((k, n_pad), jnp.bfloat16).at[:din, :dout].set(
            w.astype(jnp.bfloat16))
        weights.append(w_p)
        n_pads.append(n_pad)
        prev_n_pad = n_pad
    max_n = max(n_pads)
    b_all = jnp.zeros((len(params), max_n), jnp.float32)
    for li, (_, b) in enumerate(params):
        b_all = b_all.at[li, :b.shape[0]].set(b.astype(jnp.float32))
    return weights, b_all


@functools.partial(jax.jit, static_argnames=("out_features", "block_rows"))
def mlp_classifier_forward(x, prepared, *, out_features, block_rows=256):
    """Fused forward: hidden Linear+ReLU layers, final Linear. Returns f32."""
    weights, b_all = prepared
    num_layers = len(weights)
    B, din = x.shape
    dout_p = weights[-1].shape[1]

    # Batch tile: multiple of the packed-bf16 sublane count (16), capped.
    tb = min(block_rows, _round_up(B, BF16_SUBLANE))
    b_p = _round_up(B, tb)
    if b_p != B:
        # Tiny row pad only when the batch is ragged (e.g. 8 -> 16).
        x = jnp.pad(x, ((0, b_p - B), (0, 0)))
    grid = (b_p // tb,)

    in_specs = [pl.BlockSpec((tb, din), lambda i: (i, 0))]
    # Weights/biases: constant index maps -> stay VMEM-resident across steps.
    in_specs += [pl.BlockSpec(w.shape, lambda i: (0, 0)) for w in weights]
    in_specs += [pl.BlockSpec(b_all.shape, lambda i: (0, 0))]

    kernel = functools.partial(_fused_mlp_kernel, num_layers=num_layers)
    out_p = pl.pallas_call(
        kernel,
        grid=grid,
        out_shape=jax.ShapeDtypeStruct((b_p, dout_p), jnp.float32),
        in_specs=in_specs,
        out_specs=pl.BlockSpec((tb, dout_p), lambda i: (i, 0)),
        compiler_params=pltpu.CompilerParams(
            dimension_semantics=("parallel",)),
    )(x, *weights, b_all)
    return out_p[:B, :out_features]


def mlp_classifier_ref_f32(x, params):
    """Pure-f32 JAX reference (matches the PyTorch module exactly)."""
    for w, b in params[:-1]:
        x = jax.nn.relu(x @ w + b)
    w, b = params[-1]
    return x @ w + b


def mlp_classifier_ref_bf16(x, params):
    """Reference with the same bf16-matmul / f32-accumulate numerics."""
    h = x.astype(jnp.bfloat16)
    y = None
    for i, (w, b) in enumerate(params):
        y = jnp.dot(h, w.astype(jnp.bfloat16),
                    preferred_element_type=jnp.float32) + b
        if i < len(params) - 1:
            h = jax.nn.relu(y).astype(jnp.bfloat16)
    return y


if __name__ == "__main__":
    key = jax.random.PRNGKey(0)
    k_in, k_params = jax.random.split(key)

    batch = 8
    input_size = 32
    hidden_layers = [64, 48]
    output_size = 10

    x = jax.random.normal(k_in, (batch, input_size), jnp.float32)
    params = init_mlp_params(k_params, input_size, hidden_layers, output_size)
    prepared = prepare_params(params)

    out = mlp_classifier_forward(x, prepared, out_features=output_size)
    out = jax.block_until_ready(out)
    assert out.shape == (batch, output_size)

    # Tight check vs a reference using identical bf16-matmul numerics.
    ref_bf16 = mlp_classifier_ref_bf16(x, params)
    assert jnp.allclose(out, ref_bf16, atol=1e-4, rtol=1e-4), \
        "mismatch vs bf16-emulated reference"

    # Loose check vs the pure-f32 PyTorch-equivalent reference.
    ref_f32 = mlp_classifier_ref_f32(x, params)
    assert jnp.allclose(out, ref_f32, atol=0.15, rtol=0.15), \
        "mismatch vs f32 reference beyond bf16 tolerance"

    print("KERNEL_OK")
</pallas_src>

<mosaic_0001>
module attributes {stable_mosaic.version = 11 : i64} {
  func.func @_fused_mlp_kernel(%arg0: i32, %arg1: memref<16x32xf32, #tpu.memory_space<vmem>>, %arg2: memref<32x128xbf16, #tpu.memory_space<vmem>>, %arg3: memref<128x128xbf16, #tpu.memory_space<vmem>>, %arg4: memref<128x128xbf16, #tpu.memory_space<vmem>>, %arg5: memref<3x128xf32, #tpu.memory_space<vmem>>, %arg6: memref<16x128xf32, #tpu.memory_space<vmem>>) attributes {dimension_semantics = [#tpu.dimension_semantics<parallel>], iteration_bounds = array<i64: 1>, scalar_prefetch = 0 : i64, scratch_operands = 0 : i64, tpu.core_type = #tpu.core_type<tc>, window_params = [{transform_indices = @transform_0, window_bounds = array<i64: 16, 32>}, {pipeline_mode = #tpu.pipeline_mode<synchronous>, transform_indices = @transform_1, window_bounds = array<i64: 32, 128>}, {pipeline_mode = #tpu.pipeline_mode<synchronous>, transform_indices = @transform_2, window_bounds = array<i64: 128, 128>}, {pipeline_mode = #tpu.pipeline_mode<synchronous>, transform_indices = @transform_3, window_bounds = array<i64: 128, 128>}, {pipeline_mode = #tpu.pipeline_mode<synchronous>, transform_indices = @transform_4, window_bounds = array<i64: 3, 128>}, {transform_indices = @transform_5, window_bounds = array<i64: 16, 128>}]} {
    %c0 = arith.constant 0 : index
    %c0_0 = arith.constant 0 : index
    %0 = vector.load %arg5[%c0, %c0_0] : memref<3x128xf32, #tpu.memory_space<vmem>>, vector<3x128xf32>
    %c0_1 = arith.constant 0 : index
    %c0_2 = arith.constant 0 : index
    %1 = vector.load %arg1[%c0_1, %c0_2] : memref<16x32xf32, #tpu.memory_space<vmem>>, vector<16x32xf32>
    %2 = arith.truncf %1 : vector<16x32xf32> to vector<16x32xbf16>
    %c0_3 = arith.constant 0 : index
    %c0_4 = arith.constant 0 : index
    %3 = vector.load %arg2[%c0_3, %c0_4] : memref<32x128xbf16, #tpu.memory_space<vmem>>, vector<32x128xbf16>
    %cst = arith.constant dense<0.000000e+00> : vector<16x128xf32>
    %4 = tpu.matmul %2, %3, %cst {dimension_numbers = #tpu.dot_dimension_numbers<[1], [0], [0], [1], [0, 0, 1, 1], [], []>} : vector<16x32xbf16>, vector<32x128xbf16>, vector<16x128xf32> -> vector<16x128xf32>
    %5 = vector.extract_strided_slice %0 {offsets = [0, 0], sizes = [1, 128], strides = [1, 1]} : vector<3x128xf32> to vector<1x128xf32>
    %6 = vector.broadcast %5 : vector<1x128xf32> to vector<16x128xf32>
    %7 = arith.addf %4, %6 : vector<16x128xf32>
    %cst_5 = arith.constant 0.000000e+00 : f32
    %8 = vector.broadcast %cst_5 : f32 to vector<16x128xf32>
    %9 = arith.maximumf %7, %8 : vector<16x128xf32>
    %10 = arith.truncf %9 : vector<16x128xf32> to vector<16x128xbf16>
    %c0_6 = arith.constant 0 : index
    %c0_7 = arith.constant 0 : index
    %11 = vector.load %arg3[%c0_6, %c0_7] : memref<128x128xbf16, #tpu.memory_space<vmem>>, vector<128x128xbf16>
    %cst_8 = arith.constant dense<0.000000e+00> : vector<16x128xf32>
    %12 = tpu.matmul %10, %11, %cst_8 {dimension_numbers = #tpu.dot_dimension_numbers<[1], [0], [0], [1], [0, 0, 1, 1], [], []>} : vector<16x128xbf16>, vector<128x128xbf16>, vector<16x128xf32> -> vector<16x128xf32>
    %13 = vector.extract_strided_slice %0 {offsets = [1, 0], sizes = [1, 128], strides = [1, 1]} : vector<3x128xf32> to vector<1x128xf32>
    %14 = vector.broadcast %13 : vector<1x128xf32> to vector<16x128xf32>
    %15 = arith.addf %12, %14 : vector<16x128xf32>
    %cst_9 = arith.constant 0.000000e+00 : f32
    %16 = vector.broadcast %cst_9 : f32 to vector<16x128xf32>
    %17 = arith.maximumf %15, %16 : vector<16x128xf32>
    %18 = arith.truncf %17 : vector<16x128xf32> to vector<16x128xbf16>
    %c0_10 = arith.constant 0 : index
    %c0_11 = arith.constant 0 : index
    %19 = vector.load %arg4[%c0_10, %c0_11] : memref<128x128xbf16, #tpu.memory_space<vmem>>, vector<128x128xbf16>
    %cst_12 = arith.constant dense<0.000000e+00> : vector<16x128xf32>
    %20 = tpu.matmul %18, %19, %cst_12 {dimension_numbers = #tpu.dot_dimension_numbers<[1], [0], [0], [1], [0, 0, 1, 1], [], []>} : vector<16x128xbf16>, vector<128x128xbf16>, vector<16x128xf32> -> vector<16x128xf32>
    %21 = vector.extract_strided_slice %0 {offsets = [2, 0], sizes = [1, 128], strides = [1, 1]} : vector<3x128xf32> to vector<1x128xf32>
    %22 = vector.broadcast %21 : vector<1x128xf32> to vector<16x128xf32>
    %23 = arith.addf %20, %22 : vector<16x128xf32>
    %c0_13 = arith.constant 0 : index
    %c0_14 = arith.constant 0 : index
    %24 = vector.load %arg6[%c0_13, %c0_14] : memref<16x128xf32, #tpu.memory_space<vmem>>, vector<16x128xf32>
    tpu.vector_store %arg6[%c0_13, %c0_14], %23 {strides = array<i32>} : memref<16x128xf32, #tpu.memory_space<vmem>>, vector<16x128xf32>,
    return
  }
  func.func @transform_0(%arg0: i32) -> (i32, i32) {
    %c0_i32 = arith.constant 0 : i32
    %c0_i32_0 = arith.constant 0 : i32
    return %arg0, %c0_i32 : i32, i32
  }
  func.func @transform_1(%arg0: i32) -> (i32, i32) {
    %c0_i32 = arith.constant 0 : i32
    %c0_i32_0 = arith.constant 0 : i32
    %c0_i32_1 = arith.constant 0 : i32
    return %c0_i32, %c0_i32_0 : i32, i32
  }
  func.func @transform_2(%arg0: i32) -> (i32, i32) {
    %c0_i32 = arith.constant 0 : i32
    %c0_i32_0 = arith.constant 0 : i32
    %c0_i32_1 = arith.constant 0 : i32
    return %c0_i32, %c0_i32_0 : i32, i32
  }
  func.func @transform_3(%arg0: i32) -> (i32, i32) {
    %c0_i32 = arith.constant 0 : i32
    %c0_i32_0 = arith.constant 0 : i32
    %c0_i32_1 = arith.constant 0 : i32
    return %c0_i32, %c0_i32_0 : i32, i32
  }
  func.func @transform_4(%arg0: i32) -> (i32, i32) {
    %c0_i32 = arith.constant 0 : i32
    %c0_i32_0 = arith.constant 0 : i32
    %c0_i32_1 = arith.constant 0 : i32
    return %c0_i32, %c0_i32_0 : i32, i32
  }
  func.func @transform_5(%arg0: i32) -> (i32, i32) {
    %c0_i32 = arith.constant 0 : i32
    %c0_i32_0 = arith.constant 0 : i32
    return %arg0, %c0_i32 : i32, i32
  }
}

</mosaic_0001>

<llo_original>
// kernel: mlp_classifier_forward.1
$region0: #{mlp_classifier_forward.1}
  #allocation0 [shape = 'u32[]', space=smem, size = 0x4, offset = 0x4, fixed_abs, tag = 'smem constant byte address 0x4 - core index']
  #allocation1 [shape = 'u32[144,128]{1,0:T(1,128)}', space=vmem, size = 0x12000, scoped, tag = 'internal scratch']
  %s0 = inlined_call_operand.vmem [shape: f32[16,32], index: 0, kind: input, shape index: {}]
  %s1 = inlined_call_operand.vmem [shape: bf16[32,128], index: 1, kind: input, shape index: {}]
  %s2 = inlined_call_operand.hbm [shape: bf16[128,128], index: 2, kind: input, shape index: {}]
  %s3 = inlined_call_operand.hbm [shape: bf16[128,128], index: 3, kind: input, shape index: {}]
  %s4 = inlined_call_operand.vmem [shape: f32[3,128], index: 4, kind: input, shape index: {}]
  %s5 = inlined_call_operand.vmem [shape: f32[16,128], index: 5, kind: output, shape index: {}]
  %s6 = sld [smem:[#allocation0]]
  $region38: #{mlp_classifier_forward.1} parent=0
    _
  %s8 = ssub.s32 1, %s6
  %s9 = scalar_select 0, %s8, %s6
  $region1: #{mlp_classifier_forward.1} parent=0
    #allocation2 [shape = 'u8[32768]{0}', space=vmem, size = 0x8000, scoped, tag = 'input window, operand 2, single buffered']
    #allocation3 [shape = 's32[1]{0}', space=sflag, size = 0x4, scoped, tag = 'scoped memory for mlp_classifier_forward.1']
    #allocation4 [shape = 'u8[32768]{0}', space=vmem, size = 0x8000, scoped, tag = 'input window, operand 3, single buffered']
    #allocation5 [shape = 's32[1]{0}', space=sflag, size = 0x4, scoped, tag = 'scoped memory for mlp_classifier_forward.1']
    %10 = vsyncpa [#allocation3], 0
    %11 = vsyncpa [#allocation5], 0
    // Predicated region
    $region2: #{mlp_classifier_forward.1} parent=1 // pred_check
      _
    $region3: #{mlp_classifier_forward.1} parent=1 // pred_check_branch
      %13 = sbr.rel (0) target = $region5
    $region4: #{mlp_classifier_forward.1} parent=1 // pred_region
      _
    $region5: #{mlp_classifier_forward.1} parent=1 // pred_fallthru
      _
    // Predicated region
    $region6: #{mlp_classifier_forward.1} parent=1 // pred_check
      _
    $region7: #{mlp_classifier_forward.1} parent=1 // pred_check_branch
      %15 = sbr.rel (0) target = $region9
    $region8: #{mlp_classifier_forward.1} parent=1 // pred_region
      _
    $region9: #{mlp_classifier_forward.1} parent=1 // pred_fallthru
      _
    // Predicated region
    $region10: #{mlp_classifier_forward.1} parent=1 // pred_check
      _
    $region11: #{mlp_classifier_forward.1} parent=1 // pred_check_branch
      %17 = sbr.rel (0) target = $region13
    $region12: #{mlp_classifier_forward.1} parent=1 // pred_region
      %s19 = ssub.s32 1024, 1024
      %20 = vsyncadd [#allocation3], %s19
      %s21 = sshll.u32 [#allocation2], 4
      %s22 = int_to_ptr.vmem [resolvable:$true] %s21
      %27 = dma.hbm_to_vmem [thread:$0]  %s2, 1024, %s22, [#allocation3], 64, 64, 4
    $region13: #{mlp_classifier_forward.1} parent=1 // pred_fallthru
      _
    // Predicated region
    $region14: #{mlp_classifier_forward.1} parent=1 // pred_check
      _
    $region15: #{mlp_classifier_forward.1} parent=1 // pred_check_branch
      %29 = sbr.rel (0) target = $region17
    $region16: #{mlp_classifier_forward.1} parent=1 // pred_region
      %s31 = ssub.s32 1024, 1024
      %32 = vsyncadd [#allocation5], %s31
      %s33 = sshll.u32 [#allocation4], 4
      %s34 = int_to_ptr.vmem [resolvable:$true] %s33
      %39 = dma.hbm_to_vmem [thread:$0]  %s3, 1024, %s34, [#allocation5], 64, 64, 4
    $region17: #{mlp_classifier_forward.1} parent=1 // pred_fallthru
      _
    // Predicated region
    $region18: #{mlp_classifier_forward.1} parent=1 // pred_check
      _
    $region19: #{mlp_classifier_forward.1} parent=1 // pred_check_branch
      %41 = sbr.rel (0) target = $region21
    $region20: #{mlp_classifier_forward.1} parent=1 // pred_region
      _
    $region21: #{mlp_classifier_forward.1} parent=1 // pred_fallthru
      _
    // Predicated region
    $region22: #{mlp_classifier_forward.1} parent=1 // pred_check
      _
    $region23: #{mlp_classifier_forward.1} parent=1 // pred_check_branch
      %43 = sbr.rel (0) target = $region25
    $region24: #{mlp_classifier_forward.1} parent=1 // pred_region
      %44 = dma.done [#allocation3], 1024
    $region25: #{mlp_classifier_forward.1} parent=1 // pred_fallthru
      _
    // Predicated region
    $region26: #{mlp_classifier_forward.1} parent=1 // pred_check
      _
    $region27: #{mlp_classifier_forward.1} parent=1 // pred_check_branch
      %46 = sbr.rel (0) target = $region29
    $region28: #{mlp_classifier_forward.1} parent=1 // pred_region
      %47 = dma.done [#allocation5], 1024
    $region29: #{mlp_classifier_forward.1} parent=1 // pred_fallthru
      _
    %v49 = vld [vmem:[%s4] sm:$0x7]
    %v50 = vld [vmem:[%s0] sm:$0xff]
    %v51 = vld [vmem:[%s0 + $0x8] sm:$0xff]
    %v52 = vpack.c.bf16 %v51, %v50
    %v53 = vld [vmem:[%s1] sm:$0xf]
    %v54 = vld [vmem:[%s1 + $0x4] sm:$0xf]
    %v55 = vld [vmem:[%s1 + $0x8] sm:$0xf]
    %v56 = vld [vmem:[%s1 + $0xc] sm:$0xf]
    %v57 = vlaneseq
    %v58 = vshrl.u32 %v57, 7
    %v59 = vsub.s32 0, %v58
    %v60 = vrot.slane %v49, %v59
    %v65 = vunpack.c.l.b16 %v53
    %v66 = vunpack.c.l.b16 %v54
    %v67 = vunpack.c.l.b16 %v55
    %v68 = vunpack.c.l.b16 %v56
    %v69 = vpack.c.b16 %v66, %v65
    %v70 = vpack.c.b16 %v68, %v67
    %vm73 = vcmask 261120
    %v75 = vsel %vm73, %v52, 0
    %77 = vmatprep.subr.bf16.mxu0 0
    %78 = vmatpush1.bf16.msra.mxu0 %v69
    %79 = vmatprep.subr.bf16.mxu0 0
    %80 = vmatpush1.bf16.msra.mxu0 %v70
    %81 = vmatprep.subr.bf16.mxu0 0
    %82 = vmatpush1.bf16.msra.mxu0 0
    %83 = vmatprep.subr.bf16.mxu0 0
    %84 = vmatpush1.bf16.msra.mxu0 0
    %85 = vmatprep.subr.bf16.mxu0 0
    %86 = vmatpush1.bf16.msra.mxu0 0
    %87 = vmatprep.subr.bf16.mxu0 0
    %88 = vmatpush1.bf16.msra.mxu0 0
    %89 = vmatprep.subr.bf16.mxu0 0
    %90 = vmatpush1.bf16.msra.mxu0 0
    %91 = vmatprep.subr.bf16.mxu0 0
    %92 = vmatpush1.bf16.msra.mxu0 0
    %93 = vmatprep.subr.bf16.mxu0 0
    %94 = vmatpush1.bf16.msra.mxu0 0
    %95 = vmatprep.subr.bf16.mxu0 0
    %96 = vmatpush1.bf16.msra.mxu0 0
    %97 = vmatprep.subr.bf16.mxu0 0
    %98 = vmatpush1.bf16.msra.mxu0 0
    %99 = vmatprep.subr.bf16.mxu0 0
    %100 = vmatpush1.bf16.msra.mxu0 0
    %101 = vmatprep.subr.bf16.mxu0 0
    %102 = vmatpush1.bf16.msra.mxu0 0
    %103 = vmatprep.subr.bf16.mxu0 0
    %104 = vmatpush1.bf16.msra.mxu0 0
    %105 = vmatprep.subr.bf16.mxu0 0
    %106 = vmatpush1.bf16.msra.mxu0 0
    %107 = vmatprep.subr.bf16.mxu0 0
    %108 = vmatpush1.bf16.msra.mxu0 0
    %109 = vmatprep.mubr.bf16.mxu0 0
    %110 = vmatmul.mubr.bf16.gmra.mrb[0].mxu0 %v75
    %v111 = vpop.f32.mrb[0].mxu0
    %v112 = vadd.f32 %v60, %v111
    %v113 = vpop.f32.mrb[0].mxu0
    %v114 = vpop.f32.mrb[0].mxu0
    %v115 = vadd.f32 %v60, %v114
    %v116 = vpop.f32.mrb[0].mxu0
    %117 = vdwg.mxu0
    %v118 = vmax.f32 %v112, 0.0
    %v119 = vmax.f32 %v115, 0.0
    %v120 = vpack.c.bf16 %v119, %v118
    %v121 = vld [vmem:[#allocation2] sm:$0xf]
    %v122 = vld [vmem:[#allocation2 + $0x4] sm:$0xf]
    %v123 = vld [vmem:[#allocation2 + $0x8] sm:$0xf]
    %v124 = vld [vmem:[#allocation2 + $0xc] sm:$0xf]
    %v125 = vld [vmem:[#allocation2 + $0x10] sm:$0xf]
    %v126 = vld [vmem:[#allocation2 + $0x14] sm:$0xf]
    %v127 = vld [vmem:[#allocation2 + $0x18] sm:$0xf]
    %v128 = vld [vmem:[#allocation2 + $0x1c] sm:$0xf]
    %v129 = vld [vmem:[#allocation2 + $0x20] sm:$0xf]
    %v130 = vld [vmem:[#allocation2 + $0x24] sm:$0xf]
    %v131 = vld [vmem:[#allocation2 + $0x28] sm:$0xf]
    %v132 = vld [vmem:[#allocation2 + $0x2c] sm:$0xf]
    %v133 = vld [vmem:[#allocation2 + $0x30] sm:$0xf]
    %v134 = vld [vmem:[#allocation2 + $0x34] sm:$0xf]
    %v135 = vld [vmem:[#allocation2 + $0x38] sm:$0xf]
    %v136 = vld [vmem:[#allocation2 + $0x3c] sm:$0xf]
    %v137 = vlaneseq
    %v138 = vshrl.u32 %v137, 7
    %v139 = vsub.s32 1, %v138
    %v140 = vrot.slane %v49, %v139
    %v157 = vunpack.c.l.b16 %v121
    %v158 = vunpack.c.l.b16 %v122
    %v159 = vunpack.c.l.b16 %v123
    %v160 = vunpack.c.l.b16 %v124
    %v161 = vunpack.c.l.b16 %v125
    %v162 = vunpack.c.l.b16 %v126
    %v163 = vunpack.c.l.b16 %v127
    %v164 = vunpack.c.l.b16 %v128
    %v165 = vunpack.c.l.b16 %v129
    %v166 = vunpack.c.l.b16 %v130
    %v167 = vunpack.c.l.b16 %v131
    %v168 = vunpack.c.l.b16 %v132
    %v169 = vunpack.c.l.b16 %v133
    %v170 = vunpack.c.l.b16 %v134
    %v171 = vunpack.c.l.b16 %v135
    %v172 = vunpack.c.l.b16 %v136
    %v173 = vpack.c.b16 %v158, %v157
    %v174 = vpack.c.b16 %v160, %v159
    %v175 = vpack.c.b16 %v162, %v161
    %v176 = vpack.c.b16 %v164, %v163
    %v177 = vpack.c.b16 %v166, %v165
    %v178 = vpack.c.b16 %v168, %v167
    %v179 = vpack.c.b16 %v170, %v169
    %v180 = vpack.c.b16 %v172, %v171
    %189 = vmatprep.subr.bf16.mxu0 0
    %190 = vmatpush1.bf16.msra.mxu0 %v173
    %191 = vmatprep.subr.bf16.mxu0 0
    %192 = vmatpush1.bf16.msra.mxu0 %v174
    %193 = vmatprep.subr.bf16.mxu0 0
    %194 = vmatpush1.bf16.msra.mxu0 %v175
    %195 = vmatprep.subr.bf16.mxu0 0
    %196 = vmatpush1.bf16.msra.mxu0 %v176
    %197 = vmatprep.subr.bf16.mxu0 0
    %198 = vmatpush1.bf16.msra.mxu0 %v177
    %199 = vmatprep.subr.bf16.mxu0 0
    %200 = vmatpush1.bf16.msra.mxu0 %v178
    %201 = vmatprep.subr.bf16.mxu0 0
    %202 = vmatpush1.bf16.msra.mxu0 %v179
    %203 = vmatprep.subr.bf16.mxu0 0
    %204 = vmatpush1.bf16.msra.mxu0 %v180
    %205 = vmatprep.subr.bf16.mxu0 0
    %206 = vmatpush1.bf16.msra.mxu0 0
    %207 = vmatprep.subr.bf16.mxu0 0
    %208 = vmatpush1.bf16.msra.mxu0 0
    %209 = vmatprep.subr.bf16.mxu0 0
    %210 = vmatpush1.bf16.msra.mxu0 0
    %211 = vmatprep.subr.bf16.mxu0 0
    %212 = vmatpush1.bf16.msra.mxu0 0
    %213 = vmatprep.subr.bf16.mxu0 0
    %214 = vmatpush1.bf16.msra.mxu0 0
    %215 = vmatprep.subr.bf16.mxu0 0
    %216 = vmatpush1.bf16.msra.mxu0 0
    %217 = vmatprep.subr.bf16.mxu0 0
    %218 = vmatpush1.bf16.msra.mxu0 0
    %219 = vmatprep.subr.bf16.mxu0 0
    %220 = vmatpush1.bf16.msra.mxu0 0
    %221 = vmatprep.mubr.bf16.mxu0 0
    %222 = vmatmul.mubr.bf16.gmra.mrb[0].mxu0 %v120
    %v223 = vpop.f32.mrb[0].mxu0
    %v224 = vadd.f32 %v140, %v223
    %v225 = vpop.f32.mrb[0].mxu0
    %v226 = vpop.f32.mrb[0].mxu0
    %v227 = vadd.f32 %v140, %v226
    %v228 = vpop.f32.mrb[0].mxu0
    %229 = vdwg.mxu0
    %v230 = vmax.f32 %v224, 0.0
    %v231 = vmax.f32 %v227, 0.0
    %v232 = vpack.c.bf16 %v231, %v230
    %v233 = vld [vmem:[#allocation4] sm:$0xf]
    %v234 = vld [vmem:[#allocation4 + $0x4] sm:$0xf]
    %v235 = vld [vmem:[#allocation4 + $0x8] sm:$0xf]
    %v236 = vld [vmem:[#allocation4 + $0xc] sm:$0xf]
    %v237 = vld [vmem:[#allocation4 + $0x10] sm:$0xf]
    %v238 = vld [vmem:[#allocation4 + $0x14] sm:$0xf]
    %v239 = vld [vmem:[#allocation4 + $0x18] sm:$0xf]
    %v240 = vld [vmem:[#allocation4 + $0x1c] sm:$0xf]
    %v241 = vld [vmem:[#allocation4 + $0x20] sm:$0xf]
    %v242 = vld [vmem:[#allocation4 + $0x24] sm:$0xf]
    %v243 = vld [vmem:[#allocation4 + $0x28] sm:$0xf]
    %v244 = vld [vmem:[#allocation4 + $0x2c] sm:$0xf]
    %v245 = vld [vmem:[#allocation4 + $0x30] sm:$0xf]
    %v246 = vld [vmem:[#allocation4 + $0x34] sm:$0xf]
    %v247 = vld [vmem:[#allocation4 + $0x38] sm:$0xf]
    %v248 = vld [vmem:[#allocation4 + $0x3c] sm:$0xf]
    %v249 = vlaneseq
    %v250 = vshrl.u32 %v249, 7
    %v251 = vsub.s32 2, %v250
    %v252 = vrot.slane %v49, %v251
    %v269 = vunpack.c.l.b16 %v233
    %v270 = vunpack.c.l.b16 %v234
    %v271 = vunpack.c.l.b16 %v235
    %v272 = vunpack.c.l.b16 %v236
    %v273 = vunpack.c.l.b16 %v237
    %v274 = vunpack.c.l.b16 %v238
    %v275 = vunpack.c.l.b16 %v239
    %v276 = vunpack.c.l.b16 %v240
    %v277 = vunpack.c.l.b16 %v241
    %v278 = vunpack.c.l.b16 %v242
    %v279 = vunpack.c.l.b16 %v243
    %v280 = vunpack.c.l.b16 %v244
    %v281 = vunpack.c.l.b16 %v245
    %v282 = vunpack.c.l.b16 %v246
    %v283 = vunpack.c.l.b16 %v247
    %v284 = vunpack.c.l.b16 %v248
    %v285 = vpack.c.b16 %v270, %v269
    %v286 = vpack.c.b16 %v272, %v271
    %v287 = vpack.c.b16 %v274, %v273
    %v288 = vpack.c.b16 %v276, %v275
    %v289 = vpack.c.b16 %v278, %v277
    %v290 = vpack.c.b16 %v280, %v279
    %v291 = vpack.c.b16 %v282, %v281
    %v292 = vpack.c.b16 %v284, %v283
    %301 = vmatprep.subr.bf16.mxu0 0
    %302 = vmatpush1.bf16.msra.mxu0 %v285
    %303 = vmatprep.subr.bf16.mxu0 0
    %304 = vmatpush1.bf16.msra.mxu0 %v286
    %305 = vmatprep.subr.bf16.mxu0 0
    %306 = vmatpush1.bf16.msra.mxu0 %v287
    %307 = vmatprep.subr.bf16.mxu0 0
    %308 = vmatpush1.bf16.msra.mxu0 %v288
    %309 = vmatprep.subr.bf16.mxu0 0
    %310 = vmatpush1.bf16.msra.mxu0 %v289
    %311 = vmatprep.subr.bf16.mxu0 0
    %312 = vmatpush1.bf16.msra.mxu0 %v290
    %313 = vmatprep.subr.bf16.mxu0 0
    %314 = vmatpush1.bf16.msra.mxu0 %v291
    %315 = vmatprep.subr.bf16.mxu0 0
    %316 = vmatpush1.bf16.msra.mxu0 %v292
    %317 = vmatprep.subr.bf16.mxu0 0
    %318 = vmatpush1.bf16.msra.mxu0 0
    %319 = vmatprep.subr.bf16.mxu0 0
    %320 = vmatpush1.bf16.msra.mxu0 0
    %321 = vmatprep.subr.bf16.mxu0 0
    %322 = vmatpush1.bf16.msra.mxu0 0
    %323 = vmatprep.subr.bf16.mxu0 0
    %324 = vmatpush1.bf16.msra.mxu0 0
    %325 = vmatprep.subr.bf16.mxu0 0
    %326 = vmatpush1.bf16.msra.mxu0 0
    %327 = vmatprep.subr.bf16.mxu0 0
    %328 = vmatpush1.bf16.msra.mxu0 0
    %329 = vmatprep.subr.bf16.mxu0 0
    %330 = vmatpush1.bf16.msra.mxu0 0
    %331 = vmatprep.subr.bf16.mxu0 0
    %332 = vmatpush1.bf16.msra.mxu0 0
    %333 = vmatprep.mubr.bf16.mxu0 0
    %334 = vmatmul.mubr.bf16.gmra.mrb[0].mxu0 %v232
    %v335 = vpop.f32.mrb[0].mxu0
    %v336 = vadd.f32 %v252, %v335
    %v337 = vpop.f32.mrb[0].mxu0
    %v338 = vpop.f32.mrb[0].mxu0
    %v339 = vadd.f32 %v252, %v338
    %v340 = vpop.f32.mrb[0].mxu0
    %341 = vdwg.mxu0
    %342 = vst [vmem:[%s5] sm:$0xff] %v336
    %343 = vst [vmem:[%s5 + $0x8] sm:$0xff] %v339
    // Predicated region
    $region30: #{mlp_classifier_forward.1} parent=1 // pred_check
      _
    $region31: #{mlp_classifier_forward.1} parent=1 // pred_check_branch
      %345 = sbr.rel (0) target = $region33
    $region32: #{mlp_classifier_forward.1} parent=1 // pred_region
      _
    $region33: #{mlp_classifier_forward.1} parent=1 // pred_fallthru
      _
    // Predicated region
    $region34: #{mlp_classifier_forward.1} parent=1 // pred_check
      _
    $region35: #{mlp_classifier_forward.1} parent=1 // pred_check_branch
      %347 = sbr.rel (0) target = $region37
    $region36: #{mlp_classifier_forward.1} parent=1 // pred_region
      _
    $region37: #{mlp_classifier_forward.1} parent=1 // pred_fallthru
      _
    %348 = vsyncpa [#allocation3], 1
    %349 = vsyncpa [#allocation5], 1

</llo_original>
